<compile_context>
chip_gen: v6e
topology: v6e:2x2x1
jax: 0.10.0
libtpu: 0.0.40
codegen_flags: <defaults>
</compile_context>

<pallas_src>
import functools

import jax
import jax.numpy as jnp
from jax.experimental import pallas as pl
from jax.experimental.pallas import tpu as pltpu


def _round_up(n, m=128):
    return ((n + m - 1) // m) * m


def vanilla_rnn_kernel(x_ref, wih_ref, b1_ref, wfc_ref, bfc_ref, hid_ref, out_ref):
    x = x_ref[...]                                                   # [B, I]
    # hx=None in the PyTorch forward -> zero hidden state; W_hh term dropped,
    # b_hh pre-folded into b1. Padded lanes of wih/b1 are zero -> tanh(0)=0 there,
    # and padded rows of wfc are zero, so padding never leaks into real outputs.
    hidden = jnp.tanh(
        jnp.dot(x, wih_ref[...], preferred_element_type=jnp.float32) + b1_ref[...]
    )                                                                # [B, HP] lane-dense
    hid_ref[...] = hidden.astype(hid_ref.dtype)

    out = (jnp.dot(hidden, wfc_ref[...], preferred_element_type=jnp.float32)
           + bfc_ref[...])                                           # [B, OP] lane-dense
    out_ref[...] = out.astype(out_ref.dtype)


def prepare_params(params, input_size, hidden_size, output_size):
    """One-time transform: transpose to [in,out], fold biases, pad feature dims to 128."""
    HP = _round_up(hidden_size)
    OP = _round_up(output_size)
    wih_p = jnp.zeros((input_size, HP), jnp.float32).at[:, :hidden_size].set(params["w_ih"].T)
    wfc_p = jnp.zeros((HP, OP), jnp.float32).at[:hidden_size, :output_size].set(params["w_fc"].T)
    b1_p = jnp.zeros((1, HP), jnp.float32).at[0, :hidden_size].set(params["b_ih"] + params["b_hh"])
    bfc_p = jnp.zeros((1, OP), jnp.float32).at[0, :output_size].set(params["b_fc"])
    return {"wih_p": wih_p, "wfc_p": wfc_p, "b1_p": b1_p, "bfc_p": bfc_p,
            "hidden_size": hidden_size, "output_size": output_size}


@functools.partial(jax.jit, static_argnames=("hidden_size", "output_size"))
def _forward_impl(x, wih_p, b1_p, wfc_p, bfc_p, *, hidden_size, output_size):
    B = x.shape[0]
    HP = wih_p.shape[1]
    OP = wfc_p.shape[1]

    vmem = pl.BlockSpec(memory_space=pltpu.MemorySpace.VMEM)
    hid_p, out_p = pl.pallas_call(
        vanilla_rnn_kernel,
        out_shape=(
            jax.ShapeDtypeStruct((B, HP), jnp.float32),   # padded hidden (lane-dense)
            jax.ShapeDtypeStruct((B, OP), jnp.float32),   # padded out    (lane-dense)
        ),
        in_specs=[vmem] * 5,
        out_specs=(vmem, vmem),
    )(x, wih_p, b1_p, wfc_p, bfc_p)

    out = out_p[:, :output_size]
    hidden = hid_p[:, :hidden_size]
    return out, hidden


def vanilla_rnn_forward(x, hidden_unused, prepared):
    """x: [B, input_size]; hidden_unused is ignored (matches the PyTorch forward)."""
    del hidden_unused
    return _forward_impl(
        x, prepared["wih_p"], prepared["b1_p"], prepared["wfc_p"], prepared["bfc_p"],
        hidden_size=prepared["hidden_size"], output_size=prepared["output_size"],
    )


def init_params(key, input_size, hidden_size, output_size):
    """Deterministic PyTorch-style init (uniform(-1/sqrt(fan), 1/sqrt(fan)), [out,in] layout)."""
    ks = jax.random.split(key, 6)
    s_rnn = 1.0 / jnp.sqrt(hidden_size)
    s_fc = 1.0 / jnp.sqrt(hidden_size)
    return {
        "w_ih": jax.random.uniform(ks[0], (hidden_size, input_size), jnp.float32, -s_rnn, s_rnn),
        "b_ih": jax.random.uniform(ks[1], (hidden_size,), jnp.float32, -s_rnn, s_rnn),
        "w_hh": jax.random.uniform(ks[2], (hidden_size, hidden_size), jnp.float32, -s_rnn, s_rnn),
        "b_hh": jax.random.uniform(ks[3], (hidden_size,), jnp.float32, -s_rnn, s_rnn),
        "w_fc": jax.random.uniform(ks[4], (output_size, hidden_size), jnp.float32, -s_fc, s_fc),
        "b_fc": jax.random.uniform(ks[5], (output_size,), jnp.float32, -s_fc, s_fc),
    }


if __name__ == "__main__":
    B, INPUT, HIDDEN, OUTPUT = 2, 16, 32, 8

    key = jax.random.PRNGKey(0)
    k_x, k_p = jax.random.split(key)
    x = jax.random.normal(k_x, (B, INPUT), dtype=jnp.float32)
    hidden_in = jnp.zeros((1, HIDDEN), dtype=jnp.float32)  # from init_hidden(); ignored by forward
    params = init_params(k_p, INPUT, HIDDEN, OUTPUT)

    prepared = prepare_params(params, INPUT, HIDDEN, OUTPUT)  # one-time; not per call
    out, hidden = vanilla_rnn_forward(x, hidden_in, prepared)
    jax.block_until_ready((out, hidden))

    # Pure-JAX reference check (original PyTorch semantics, W_hh term = 0)
    h_ref = jnp.tanh(x @ params["w_ih"].T + params["b_ih"] + params["b_hh"])
    o_ref = h_ref @ params["w_fc"].T + params["b_fc"]
    assert out.shape == (B, OUTPUT) and hidden.shape == (B, HIDDEN)
    assert jnp.allclose(hidden, h_ref, atol=1e-5), "hidden mismatch"
    assert jnp.allclose(out, o_ref, atol=1e-5), "out mismatch"

    print("KERNEL_OK")
</pallas_src>

<mosaic_0001>
module attributes {stable_mosaic.version = 11 : i64} {
  func.func @vanilla_rnn_kernel(%arg0: memref<2x16xf32, #tpu.memory_space<vmem>>, %arg1: memref<16x128xf32, #tpu.memory_space<vmem>>, %arg2: memref<1x128xf32, #tpu.memory_space<vmem>>, %arg3: memref<128x128xf32, #tpu.memory_space<vmem>>, %arg4: memref<1x128xf32, #tpu.memory_space<vmem>>, %arg5: memref<2x128xf32, #tpu.memory_space<vmem>>, %arg6: memref<2x128xf32, #tpu.memory_space<vmem>>) attributes {dimension_semantics = [], scalar_prefetch = 0 : i64, scratch_operands = 0 : i64, tpu.core_type = #tpu.core_type<tc>} {
    %c0 = arith.constant 0 : index
    %c0_0 = arith.constant 0 : index
    %0 = vector.load %arg0[%c0, %c0_0] : memref<2x16xf32, #tpu.memory_space<vmem>>, vector<2x16xf32>
    %c0_1 = arith.constant 0 : index
    %c0_2 = arith.constant 0 : index
    %1 = vector.load %arg1[%c0_1, %c0_2] : memref<16x128xf32, #tpu.memory_space<vmem>>, vector<16x128xf32>
    %cst = arith.constant dense<0.000000e+00> : vector<2x128xf32>
    %2 = tpu.matmul %0, %1, %cst {dimension_numbers = #tpu.dot_dimension_numbers<[1], [0], [0], [1], [0, 0, 1, 1], [], []>} : vector<2x16xf32>, vector<16x128xf32>, vector<2x128xf32> -> vector<2x128xf32>
    %c0_3 = arith.constant 0 : index
    %c0_4 = arith.constant 0 : index
    %3 = vector.load %arg2[%c0_3, %c0_4] : memref<1x128xf32, #tpu.memory_space<vmem>>, vector<1x128xf32>
    %4 = vector.broadcast %3 : vector<1x128xf32> to vector<2x128xf32>
    %5 = arith.addf %2, %4 : vector<2x128xf32>
    %6 = math.tanh %5 : vector<2x128xf32>
    %c0_5 = arith.constant 0 : index
    %c0_6 = arith.constant 0 : index
    %7 = vector.load %arg5[%c0_5, %c0_6] : memref<2x128xf32, #tpu.memory_space<vmem>>, vector<2x128xf32>
    tpu.vector_store %arg5[%c0_5, %c0_6], %6 {strides = array<i32>} : memref<2x128xf32, #tpu.memory_space<vmem>>, vector<2x128xf32>,
    %c0_7 = arith.constant 0 : index
    %c0_8 = arith.constant 0 : index
    %8 = vector.load %arg3[%c0_7, %c0_8] : memref<128x128xf32, #tpu.memory_space<vmem>>, vector<128x128xf32>
    %cst_9 = arith.constant dense<0.000000e+00> : vector<2x128xf32>
    %9 = tpu.matmul %6, %8, %cst_9 {dimension_numbers = #tpu.dot_dimension_numbers<[1], [0], [0], [1], [0, 0, 1, 1], [], []>} : vector<2x128xf32>, vector<128x128xf32>, vector<2x128xf32> -> vector<2x128xf32>
    %c0_10 = arith.constant 0 : index
    %c0_11 = arith.constant 0 : index
    %10 = vector.load %arg4[%c0_10, %c0_11] : memref<1x128xf32, #tpu.memory_space<vmem>>, vector<1x128xf32>
    %11 = vector.broadcast %10 : vector<1x128xf32> to vector<2x128xf32>
    %12 = arith.addf %9, %11 : vector<2x128xf32>
    %c0_12 = arith.constant 0 : index
    %c0_13 = arith.constant 0 : index
    %13 = vector.load %arg6[%c0_12, %c0_13] : memref<2x128xf32, #tpu.memory_space<vmem>>, vector<2x128xf32>
    tpu.vector_store %arg6[%c0_12, %c0_13], %12 {strides = array<i32>} : memref<2x128xf32, #tpu.memory_space<vmem>>, vector<2x128xf32>,
    return
  }
}

</mosaic_0001>

<llo_original>
// kernel: _forward_impl.1
$region0: #{_forward_impl.1}
  #allocation0 [shape = 'u32[]', space=smem, size = 0x4, offset = 0x4, fixed_abs, tag = 'smem constant byte address 0x4 - core index']
  #allocation1 [shape = 'u32[144,128]{1,0:T(1,128)}', space=vmem, size = 0x12000, scoped, tag = 'internal scratch']
  %s0 = inlined_call_operand.hbm [shape: f32[2,16], index: 0, kind: input, shape index: {}]
  %s1 = inlined_call_operand.hbm [shape: f32[16,128], index: 1, kind: input, shape index: {}]
  %s2 = inlined_call_operand.vmem [shape: f32[1,128], index: 2, kind: input, shape index: {}]
  %s3 = inlined_call_operand.hbm [shape: f32[128,128], index: 3, kind: input, shape index: {}]
  %s4 = inlined_call_operand.vmem [shape: f32[1,128], index: 4, kind: input, shape index: {}]
  %s5 = inlined_call_operand.hbm [shape: f32[2,128], index: 5, kind: output, shape index: {0}]
  %s6 = inlined_call_operand.hbm [shape: f32[2,128], index: 6, kind: output, shape index: {1}]
  %7 = xla_tuple %s5, %s6
  %s8 = sld [smem:[#allocation0]]
  $region50: #{_forward_impl.1} parent=0
    _
  %s10 = ssub.s32 1, %s8
  %s11 = scalar_select 0, %s10, %s8
  $region1: #{_forward_impl.1} parent=0
    #allocation2 [shape = 'u8[1024]{0}', space=vmem, size = 0x400, scoped, tag = 'input window, operand 0, single buffered']
    #allocation3 [shape = 's32[1]{0}', space=sflag, size = 0x4, scoped, tag = 'scoped memory for _forward_impl.1']
    #allocation4 [shape = 's32[1]{0}', space=sflag, size = 0x4, scoped, tag = 'scoped memory for _forward_impl.1']
    #allocation5 [shape = 'u8[8192]{0}', space=vmem, size = 0x2000, scoped, tag = 'input window, operand 1, single buffered']
    #allocation6 [shape = 's32[1]{0}', space=sflag, size = 0x4, scoped, tag = 'scoped memory for _forward_impl.1']
    #allocation7 [shape = 'u8[65536]{0}', space=vmem, size = 0x10000, scoped, tag = 'input window, operand 3, single buffered']
    #allocation8 [shape = 'u8[1024]{0}', space=vmem, size = 0x400, scoped, tag = 'output window, operand 0, single buffered']
    #allocation9 [shape = 'u8[1024]{0}', space=vmem, size = 0x400, scoped, tag = 'output window, operand 1, single buffered']
    #allocation10 [shape = 's32[1]{0}', space=sflag, size = 0x4, scoped, tag = 'scoped memory for _forward_impl.1']
    %12 = vsyncpa [#allocation3], 0
    %13 = vsyncpa [#allocation6], 0
    %14 = vsyncpa [#allocation4], 0
    %15 = vsyncpa [#allocation10], 0
    // Predicated region
    $region2: #{_forward_impl.1} parent=1 // pred_check
      _
    $region3: #{_forward_impl.1} parent=1 // pred_check_branch
      %17 = sbr.rel (0) target = $region5
    $region4: #{_forward_impl.1} parent=1 // pred_region
      %s19 = ssub.s32 32, 32
      %20 = vsyncadd [#allocation3], %s19
      %s22 = sshll.u32 [#allocation2], 4
      %s23 = int_to_ptr.vmem [resolvable:$true] %s22
      %25 = dma.hbm_to_vmem [thread:$0]  %s0, 32, %s23, [#allocation3]
    $region5: #{_forward_impl.1} parent=1 // pred_fallthru
      _
    // Predicated region
    $region6: #{_forward_impl.1} parent=1 // pred_check
      _
    $region7: #{_forward_impl.1} parent=1 // pred_check_branch
      %27 = sbr.rel (0) target = $region9
    $region8: #{_forward_impl.1} parent=1 // pred_region
      %s29 = ssub.s32 256, 256
      %30 = vsyncadd [#allocation6], %s29
      %s31 = sshll.u32 [#allocation5], 4
      %s32 = int_to_ptr.vmem [resolvable:$true] %s31
      %37 = dma.hbm_to_vmem [thread:$0]  %s1, 256, %s32, [#allocation6], 128, 128, 8
    $region9: #{_forward_impl.1} parent=1 // pred_fallthru
      _
    // Predicated region
    $region10: #{_forward_impl.1} parent=1 // pred_check
      _
    $region11: #{_forward_impl.1} parent=1 // pred_check_branch
      %39 = sbr.rel (0) target = $region13
    $region12: #{_forward_impl.1} parent=1 // pred_region
      _
    $region13: #{_forward_impl.1} parent=1 // pred_fallthru
      _
    // Predicated region
    $region14: #{_forward_impl.1} parent=1 // pred_check
      _
    $region15: #{_forward_impl.1} parent=1 // pred_check_branch
      %41 = sbr.rel (0) target = $region17
    $region16: #{_forward_impl.1} parent=1 // pred_region
      %s43 = ssub.s32 2048, 2048
      %44 = vsyncadd [#allocation6], %s43
      %s45 = sshll.u32 [#allocation7], 4
      %s46 = int_to_ptr.vmem [resolvable:$true] %s45
      %51 = dma.hbm_to_vmem [thread:$0]  %s3, 2048, %s46, [#allocation6], 128, 128, 8
    $region17: #{_forward_impl.1} parent=1 // pred_fallthru
      _
    // Predicated region
    $region18: #{_forward_impl.1} parent=1 // pred_check
      _
    $region19: #{_forward_impl.1} parent=1 // pred_check_branch
      %53 = sbr.rel (0) target = $region21
    $region20: #{_forward_impl.1} parent=1 // pred_region
      _
    $region21: #{_forward_impl.1} parent=1 // pred_fallthru
      _
    // Predicated region
    $region22: #{_forward_impl.1} parent=1 // pred_check
      _
    $region23: #{_forward_impl.1} parent=1 // pred_check_branch
      %55 = sbr.rel (0) target = $region25
    $region24: #{_forward_impl.1} parent=1 // pred_region
      %56 = dma.done [#allocation3], 32
    $region25: #{_forward_impl.1} parent=1 // pred_fallthru
      _
    // Predicated region
    $region26: #{_forward_impl.1} parent=1 // pred_check
      _
    $region27: #{_forward_impl.1} parent=1 // pred_check_branch
      %58 = sbr.rel (0) target = $region29
    $region28: #{_forward_impl.1} parent=1 // pred_region
      %59 = dma.done [#allocation6], 256
    $region29: #{_forward_impl.1} parent=1 // pred_fallthru
      _
    // Predicated region
    $region30: #{_forward_impl.1} parent=1 // pred_check
      _
    $region31: #{_forward_impl.1} parent=1 // pred_check_branch
      %61 = sbr.rel (0) target = $region33
    $region32: #{_forward_impl.1} parent=1 // pred_region
      %62 = dma.done [#allocation6], 2048
    $region33: #{_forward_impl.1} parent=1 // pred_fallthru
      _
    %v63 = vld [vmem:[#allocation2] sm:$0x3]
    %v64 = vld [vmem:[#allocation5] sm:$0xff]
    %v65 = vld [vmem:[#allocation5 + $0x8] sm:$0xff]
    %v66 = vld [vmem:[%s2] sm:$0x1]
    %v68 = vlaneseq
    %v69 = vshrl.u32 %v68, 7
    %v70 = vsub.s32 0, %v69
    %v71 = vrot.slane %v66, %v70
    %vm73 = vcmask 130048
    %v75 = vsel %vm73, %v63, 0
    %77 = vmatprep.subr.mxu0 0.0
    %78 = vmatpush1.msra.mxu0 0.0
    %79 = vmatprep.subr.mxu0 0.0
    %80 = vmatpush1.msra.mxu0 0.0
    %81 = vmatprep.subr.mxu0 0.0
    %82 = vmatpush1.msra.mxu0 0.0
    %83 = vmatprep.subr.mxu0 0.0
    %84 = vmatpush1.msra.mxu0 0.0
    %85 = vmatprep.subr.mxu0 0.0
    %86 = vmatpush1.msra.mxu0 0.0
    %87 = vmatprep.subr.mxu0 0.0
    %88 = vmatpush1.msra.mxu0 0.0
    %89 = vmatprep.subr.mxu0 0.0
    %90 = vmatpush1.msra.mxu0 0.0
    %91 = vmatprep.subr.mxu0 0.0
    %92 = vmatpush1.msra.mxu0 0.0
    %93 = vmatprep.subr.mxu0 0.0
    %94 = vmatpush1.msra.mxu0 0.0
    %95 = vmatprep.subr.mxu0 0.0
    %96 = vmatpush1.msra.mxu0 0.0
    %97 = vmatprep.subr.mxu0 0.0
    %98 = vmatpush1.msra.mxu0 0.0
    %99 = vmatprep.subr.mxu0 0.0
    %100 = vmatpush1.msra.mxu0 0.0
    %101 = vmatprep.subr.mxu0 0.0
    %102 = vmatpush1.msra.mxu0 0.0
    %103 = vmatprep.subr.mxu0 0.0
    %104 = vmatpush1.msra.mxu0 0.0
    %105 = vmatprep.subr.mxu0 0.0
    %106 = vmatpush1.msra.mxu0 %v65
    %107 = vmatprep.subr.mxu0 0.0
    %108 = vmatpush1.msra.mxu0 %v64
    %109 = vmatprep.subr.mxu0 0.0
    %110 = vmatpush2.msra.mxu0 0.0
    %111 = vmatprep.subr.mxu0 0.0
    %112 = vmatpush2.msra.mxu0 0.0
    %113 = vmatprep.subr.mxu0 0.0
    %114 = vmatpush2.msra.mxu0 0.0
    %115 = vmatprep.subr.mxu0 0.0
    %116 = vmatpush2.msra.mxu0 0.0
    %117 = vmatprep.subr.mxu0 0.0
    %118 = vmatpush2.msra.mxu0 0.0
    %119 = vmatprep.subr.mxu0 0.0
    %120 = vmatpush2.msra.mxu0 0.0
    %121 = vmatprep.subr.mxu0 0.0
    %122 = vmatpush2.msra.mxu0 0.0
    %123 = vmatprep.subr.mxu0 0.0
    %124 = vmatpush2.msra.mxu0 0.0
    %125 = vmatprep.subr.mxu0 0.0
    %126 = vmatpush2.msra.mxu0 0.0
    %127 = vmatprep.subr.mxu0 0.0
    %128 = vmatpush2.msra.mxu0 0.0
    %129 = vmatprep.subr.mxu0 0.0
    %130 = vmatpush2.msra.mxu0 0.0
    %131 = vmatprep.subr.mxu0 0.0
    %132 = vmatpush2.msra.mxu0 0.0
    %133 = vmatprep.subr.mxu0 0.0
    %134 = vmatpush2.msra.mxu0 0.0
    %135 = vmatprep.subr.mxu0 0.0
    %136 = vmatpush2.msra.mxu0 0.0
    %137 = vmatprep.subr.mxu0 0.0
    %138 = vmatpush2.msra.mxu0 0.0
    %139 = vmatprep.subr.mxu0 0.0
    %140 = vmatpush2.msra.mxu0 0.0
    %141 = vmatprep.mubr.f32.mxu0 0.0
    %142 = vmatmul.mubr.f32.gmra.mxu0 %v75
    %v143 = vpop.f32.mrf.mxu0
    %v144 = vadd.f32 %v71, %v143
    %v145 = vpop.f32.mrf.mxu0
    %146 = vdwg.mxu0
    %v147 = vtanh.pop %v144
    %148 = vst [vmem:[#allocation8] sm:$0x3] %v147
    %v149 = vld [vmem:[#allocation7] sm:$0xff]
    %v150 = vld [vmem:[#allocation7 + $0x8] sm:$0xff]
    %v151 = vld [vmem:[#allocation7 + $0x10] sm:$0xff]
    %v152 = vld [vmem:[#allocation7 + $0x18] sm:$0xff]
    %v153 = vld [vmem:[#allocation7 + $0x20] sm:$0xff]
    %v154 = vld [vmem:[#allocation7 + $0x28] sm:$0xff]
    %v155 = vld [vmem:[#allocation7 + $0x30] sm:$0xff]
    %v156 = vld [vmem:[#allocation7 + $0x38] sm:$0xff]
    %v157 = vld [vmem:[#allocation7 + $0x40] sm:$0xff]
    %v158 = vld [vmem:[#allocation7 + $0x48] sm:$0xff]
    %v159 = vld [vmem:[#allocation7 + $0x50] sm:$0xff]
    %v160 = vld [vmem:[#allocation7 + $0x58] sm:$0xff]
    %v161 = vld [vmem:[#allocation7 + $0x60] sm:$0xff]
    %v162 = vld [vmem:[#allocation7 + $0x68] sm:$0xff]
    %v163 = vld [vmem:[#allocation7 + $0x70] sm:$0xff]
    %v164 = vld [vmem:[#allocation7 + $0x78] sm:$0xff]
    %v165 = vld [vmem:[%s4] sm:$0x1]
    %v167 = vlaneseq
    %v168 = vshrl.u32 %v167, 7
    %v169 = vsub.s32 0, %v168
    %v170 = vrot.slane %v165, %v169
    %172 = vmatprep.subr.mxu0 0.0
    %173 = vmatpush1.msra.mxu0 %v164
    %174 = vmatprep.subr.mxu0 0.0
    %175 = vmatpush1.msra.mxu0 %v163
    %176 = vmatprep.subr.mxu0 0.0
    %177 = vmatpush1.msra.mxu0 %v162
    %178 = vmatprep.subr.mxu0 0.0
    %179 = vmatpush1.msra.mxu0 %v161
    %180 = vmatprep.subr.mxu0 0.0
    %181 = vmatpush1.msra.mxu0 %v160
    %182 = vmatprep.subr.mxu0 0.0
    %183 = vmatpush1.msra.mxu0 %v159
    %184 = vmatprep.subr.mxu0 0.0
    %185 = vmatpush1.msra.mxu0 %v158
    %186 = vmatprep.subr.mxu0 0.0
    %187 = vmatpush1.msra.mxu0 %v157
    %188 = vmatprep.subr.mxu0 0.0
    %189 = vmatpush1.msra.mxu0 %v156
    %190 = vmatprep.subr.mxu0 0.0
    %191 = vmatpush1.msra.mxu0 %v155
    %192 = vmatprep.subr.mxu0 0.0
    %193 = vmatpush1.msra.mxu0 %v154
    %194 = vmatprep.subr.mxu0 0.0
    %195 = vmatpush1.msra.mxu0 %v153
    %196 = vmatprep.subr.mxu0 0.0
    %197 = vmatpush1.msra.mxu0 %v152
    %198 = vmatprep.subr.mxu0 0.0
    %199 = vmatpush1.msra.mxu0 %v151
    %200 = vmatprep.subr.mxu0 0.0
    %201 = vmatpush1.msra.mxu0 %v150
    %202 = vmatprep.subr.mxu0 0.0
    %203 = vmatpush1.msra.mxu0 %v149
    %204 = vmatprep.subr.mxu0 0.0
    %205 = vmatpush2.msra.mxu0 0.0
    %206 = vmatprep.subr.mxu0 0.0
    %207 = vmatpush2.msra.mxu0 0.0
    %208 = vmatprep.subr.mxu0 0.0
    %209 = vmatpush2.msra.mxu0 0.0
    %210 = vmatprep.subr.mxu0 0.0
    %211 = vmatpush2.msra.mxu0 0.0
    %212 = vmatprep.subr.mxu0 0.0
    %213 = vmatpush2.msra.mxu0 0.0
    %214 = vmatprep.subr.mxu0 0.0
    %215 = vmatpush2.msra.mxu0 0.0
    %216 = vmatprep.subr.mxu0 0.0
    %217 = vmatpush2.msra.mxu0 0.0
    %218 = vmatprep.subr.mxu0 0.0
    %219 = vmatpush2.msra.mxu0 0.0
    %220 = vmatprep.subr.mxu0 0.0
    %221 = vmatpush2.msra.mxu0 0.0
    %222 = vmatprep.subr.mxu0 0.0
    %223 = vmatpush2.msra.mxu0 0.0
    %224 = vmatprep.subr.mxu0 0.0
    %225 = vmatpush2.msra.mxu0 0.0
    %226 = vmatprep.subr.mxu0 0.0
    %227 = vmatpush2.msra.mxu0 0.0
    %228 = vmatprep.subr.mxu0 0.0
    %229 = vmatpush2.msra.mxu0 0.0
    %230 = vmatprep.subr.mxu0 0.0
    %231 = vmatpush2.msra.mxu0 0.0
    %232 = vmatprep.subr.mxu0 0.0
    %233 = vmatpush2.msra.mxu0 0.0
    %234 = vmatprep.subr.mxu0 0.0
    %235 = vmatpush2.msra.mxu0 0.0
    %236 = vmatprep.mubr.f32.mxu0 0.0
    %237 = vmatmul.mubr.f32.gmra.mxu0 %v147
    %v238 = vpop.f32.mrf.mxu0
    %v239 = vadd.f32 %v170, %v238
    %v240 = vpop.f32.mrf.mxu0
    %241 = vdwg.mxu0
    %242 = vst [vmem:[#allocation9] sm:$0x3] %v239
    // Predicated region
    $region34: #{_forward_impl.1} parent=1 // pred_check
      _
    $region35: #{_forward_impl.1} parent=1 // pred_check_branch
      %244 = sbr.rel (0) target = $region37
    $region36: #{_forward_impl.1} parent=1 // pred_region
      %s246 = ssub.s32 32, 32
      %247 = vsyncadd [#allocation4], %s246
      %s249 = sshll.u32 [#allocation8], 4
      %s250 = int_to_ptr.vmem [resolvable:$true] %s249
      %252 = dma.vmem_to_hbm [thread:$0]  %s250, 32, %s5, [#allocation4]
    $region37: #{_forward_impl.1} parent=1 // pred_fallthru
      _
    // Predicated region
    $region38: #{_forward_impl.1} parent=1 // pred_check
      _
    $region39: #{_forward_impl.1} parent=1 // pred_check_branch
      %254 = sbr.rel (0) target = $region41
    $region40: #{_forward_impl.1} parent=1 // pred_region
      %s256 = ssub.s32 32, 32
      %257 = vsyncadd [#allocation10], %s256
      %s259 = sshll.u32 [#allocation9], 4
      %s260 = int_to_ptr.vmem [resolvable:$true] %s259
      %262 = dma.vmem_to_hbm [thread:$0]  %s260, 32, %s6, [#allocation10]
    $region41: #{_forward_impl.1} parent=1 // pred_fallthru
      _
    // Predicated region
    $region42: #{_forward_impl.1} parent=1 // pred_check
      _
    $region43: #{_forward_impl.1} parent=1 // pred_check_branch
      %264 = sbr.rel (0) target = $region45
    $region44: #{_forward_impl.1} parent=1 // pred_region
      %265 = dma.done [#allocation4], 32
    $region45: #{_forward_impl.1} parent=1 // pred_fallthru
      _
    // Predicated region
    $region46: #{_forward_impl.1} parent=1 // pred_check
      _
    $region47: #{_forward_impl.1} parent=1 // pred_check_branch
      %267 = sbr.rel (0) target = $region49
    $region48: #{_forward_impl.1} parent=1 // pred_region
      %268 = dma.done [#allocation10], 32
    $region49: #{_forward_impl.1} parent=1 // pred_fallthru
      _
    %269 = vsyncpa [#allocation3], 1
    %270 = vsyncpa [#allocation6], 1
    %271 = vsyncpa [#allocation4], 1
    %272 = vsyncpa [#allocation10], 1

</llo_original>
